<compile_context>
chip_gen: v7x
topology: tpu7x:2x2x1
jax: 0.10.0
libtpu: 0.0.40
codegen_flags: <defaults>
</compile_context>

<pallas_src>
import functools

import jax
import jax.numpy as jnp
from jax.experimental import pallas as pl
from jax.experimental.pallas import tpu as pltpu


def _prenorm_conv1x1_kernel(x_ref, w_ref, b_ref, o_ref, *, eps):
    # x_ref: (C, TILE)   channels x pixels block of one batch element
    # w_ref: (C_out, C_in) 1x1-conv weight with the LayerNorm gain pre-folded
    # b_ref: (C_out, 1)  conv bias
    x = x_ref[...].astype(jnp.float32)

    # LayerNorm over channels (sublane axis), biased variance, f32 statistics.
    # Centered form kept on purpose (numerically safe; C is small so the extra
    # XLU reduce is off the critical path of the mem-bound kernel).
    mean = jnp.mean(x, axis=0, keepdims=True)                 # (1, TILE)
    centered = x - mean
    var = jnp.mean(centered * centered, axis=0, keepdims=True)
    inv_std = jax.lax.rsqrt(var + jnp.float32(eps))
    normed = centered * inv_std                                # gain folded into w

    # fn = Conv2d(dim, dim, 1): per-pixel channel matmul + bias (MXU).
    y = jnp.dot(w_ref[...], normed.astype(w_ref.dtype),
                preferred_element_type=jnp.float32)            # (C_out, TILE)
    o_ref[...] = (y + b_ref[...].astype(jnp.float32)).astype(o_ref.dtype)


def _pick_pixel_tile(hw, cap=2048):
    """Largest multiple of 128 that divides hw (amortizes ~0.35us/step overhead);
    fall back to the full extent (always a legal block dim)."""
    if hw % 128 != 0:
        return hw
    t = max(128, (min(hw, cap) // 128) * 128)
    while hw % t != 0:
        t -= 128
    return t


@functools.partial(jax.jit, static_argnames=("pix_tile",))
def prenorm_conv1x1(x_nchw, g, w, b, *, pix_tile=None):
    """PreNorm(dim, Conv2d(dim, dim, 1)) forward.

    x_nchw: (B, C, H, W); g: (C,) LayerNorm gain; w: (C_out, C_in); b: (C_out,).
    """
    B, C, H, W = x_nchw.shape
    hw = H * W
    tile = pix_tile if pix_tile is not None else _pick_pixel_tile(hw)
    n_tiles = hw // tile

    # Matches the PyTorch LayerNorm eps selection.
    eps = 1e-5 if x_nchw.dtype == jnp.float32 else 1e-3

    # Free, contiguous reshape — no HBM transpose on input or output.
    x3d = x_nchw.reshape(B, C, hw)

    # Fold the LayerNorm gain into the conv weight: w_f[o, c] = w[o, c] * g[c].
    w_folded = (w * g.reshape(1, C)).astype(x_nchw.dtype)
    b2d = b.reshape(C, 1).astype(jnp.float32)

    # VMEM budget: double-buffered (C, tile) in/out blocks + (double-buffered)
    # weight/bias; clamp to [16 MiB, 48 MiB] so it is safe on v5e/v6e/v7x.
    block_bytes = C * tile * x_nchw.dtype.itemsize
    budget = 4 * block_bytes + 2 * (C * C * w_folded.dtype.itemsize + C * 4)
    vmem_limit = int(min(max(budget + (2 << 20), 16 << 20), 48 << 20))

    out3d = pl.pallas_call(
        functools.partial(_prenorm_conv1x1_kernel, eps=eps),
        out_shape=jax.ShapeDtypeStruct((B, C, hw), x_nchw.dtype),
        grid_spec=pltpu.PrefetchScalarGridSpec(
            num_scalar_prefetch=0,
            grid=(B, n_tiles),
            in_specs=[
                # x tile: batch dim squeezed out of the kernel ref.
                pl.BlockSpec((pl.Squeezed(), C, tile),
                             lambda bi, pi: (bi, 0, pi)),
                # w / b are grid-invariant (constant index_map) -> DMA'd once.
                # (pl.Buffered(1) could drop their double buffer on VMEM-tight
                #  v7x; left at the default for maximum portability.)
                pl.BlockSpec((C, C), lambda bi, pi: (0, 0)),
                pl.BlockSpec((C, 1), lambda bi, pi: (0, 0)),
            ],
            out_specs=pl.BlockSpec((pl.Squeezed(), C, tile),
                                   lambda bi, pi: (bi, 0, pi)),
        ),
        compiler_params=pltpu.CompilerParams(
            dimension_semantics=("parallel", "parallel"),
            vmem_limit_bytes=vmem_limit),
    )(x3d, w_folded, b2d)

    return out3d.reshape(B, C, H, W)


def _reference(x_nchw, g, w, b):
    # Plain-JAX reference matching the PyTorch PreNorm(LayerNorm + 1x1 conv).
    eps = 1e-5 if x_nchw.dtype == jnp.float32 else 1e-3
    mean = jnp.mean(x_nchw, axis=1, keepdims=True)
    var = jnp.mean((x_nchw - mean) ** 2, axis=1, keepdims=True)  # unbiased=False
    normed = (x_nchw - mean) * jax.lax.rsqrt(var + eps) * g.reshape(1, -1, 1, 1)
    return jnp.einsum("bchw,oc->bohw", normed, w) + b.reshape(1, -1, 1, 1)


if __name__ == "__main__":
    key = jax.random.PRNGKey(0)
    B, C, H, W = 2, 4, 16, 16  # small NCHW input; PreNorm dim = C = 4

    kx, kg, kw, kb = jax.random.split(key, 4)
    x = jax.random.normal(kx, (B, C, H, W), dtype=jnp.float32)

    # Parameters (shapes from the module __init__); g made non-trivial so the
    # gain-folding path is actually exercised.
    g = 1.0 + 0.1 * jax.random.normal(kg, (C,), dtype=jnp.float32)   # LayerNorm.g
    w = jax.random.normal(kw, (C, C), dtype=jnp.float32) * 0.1       # Conv2d(dim,dim,1) weight
    b = jax.random.normal(kb, (C,), dtype=jnp.float32) * 0.1         # conv bias

    out = prenorm_conv1x1(x, g, w, b)
    out = jax.block_until_ready(out)

    ref = _reference(x, g, w, b)
    assert out.shape == (B, C, H, W)
    assert jnp.allclose(out, ref, atol=1e-5, rtol=1e-5), "mismatch vs reference"

    print("KERNEL_OK")
</pallas_src>

<mosaic_0001>
module attributes {stable_mosaic.version = 11 : i64} {
  func.func @_prenorm_conv1x1_kernel(%arg0: i32, %arg1: i32, %arg2: memref<1x4x256xf32, #tpu.memory_space<vmem>>, %arg3: memref<4x4xf32, #tpu.memory_space<vmem>>, %arg4: memref<4x1xf32, #tpu.memory_space<vmem>>, %arg5: memref<1x4x256xf32, #tpu.memory_space<vmem>>) attributes {dimension_semantics = [#tpu.dimension_semantics<parallel>, #tpu.dimension_semantics<parallel>], iteration_bounds = array<i64: 2, 1>, scalar_prefetch = 0 : i64, scratch_operands = 0 : i64, tpu.core_type = #tpu.core_type<tc>, window_params = [{transform_indices = @transform_0, window_bounds = array<i64: 1, 4, 256>}, {pipeline_mode = #tpu.pipeline_mode<synchronous>, transform_indices = @transform_1, window_bounds = array<i64: 4, 4>}, {pipeline_mode = #tpu.pipeline_mode<synchronous>, transform_indices = @transform_2, window_bounds = array<i64: 4, 1>}, {transform_indices = @transform_3, window_bounds = array<i64: 1, 4, 256>}]} {
    %c0 = arith.constant 0 : index
    %c0_0 = arith.constant 0 : index
    %c0_1 = arith.constant 0 : index
    %0 = vector.load %arg2[%c0, %c0_0, %c0_1] : memref<1x4x256xf32, #tpu.memory_space<vmem>>, vector<1x4x256xf32>
    %1 = vector.shape_cast %0 : vector<1x4x256xf32> to vector<4x256xf32>
    %cst = arith.constant dense<0.000000e+00> : vector<256xf32>
    %2 = vector.multi_reduction <add>, %1, %cst [0] : vector<4x256xf32> to vector<256xf32>
    %3 = vector.shape_cast %2 : vector<256xf32> to vector<1x256xf32>
    %cst_2 = arith.constant 4.000000e+00 : f32
    %4 = vector.broadcast %cst_2 : f32 to vector<1x256xf32>
    %5 = arith.divf %3, %4 : vector<1x256xf32>
    %6 = vector.broadcast %5 : vector<1x256xf32> to vector<4x256xf32>
    %7 = arith.subf %1, %6 : vector<4x256xf32>
    %8 = arith.mulf %7, %7 : vector<4x256xf32>
    %cst_3 = arith.constant dense<0.000000e+00> : vector<256xf32>
    %9 = vector.multi_reduction <add>, %8, %cst_3 [0] : vector<4x256xf32> to vector<256xf32>
    %10 = vector.shape_cast %9 : vector<256xf32> to vector<1x256xf32>
    %cst_4 = arith.constant 4.000000e+00 : f32
    %11 = vector.broadcast %cst_4 : f32 to vector<1x256xf32>
    %12 = arith.divf %10, %11 : vector<1x256xf32>
    %cst_5 = arith.constant 9.99999974E-6 : f32
    %13 = vector.broadcast %cst_5 : f32 to vector<1x256xf32>
    %14 = arith.addf %12, %13 : vector<1x256xf32>
    %15 = math.rsqrt %14 : vector<1x256xf32>
    %16 = vector.broadcast %15 : vector<1x256xf32> to vector<4x256xf32>
    %17 = arith.mulf %7, %16 : vector<4x256xf32>
    %c0_6 = arith.constant 0 : index
    %c0_7 = arith.constant 0 : index
    %18 = vector.load %arg3[%c0_6, %c0_7] : memref<4x4xf32, #tpu.memory_space<vmem>>, vector<4x4xf32>
    %cst_8 = arith.constant dense<0.000000e+00> : vector<4x256xf32>
    %19 = tpu.matmul %18, %17, %cst_8 {dimension_numbers = #tpu.dot_dimension_numbers<[1], [0], [0], [1], [0, 0, 1, 1], [], []>} : vector<4x4xf32>, vector<4x256xf32>, vector<4x256xf32> -> vector<4x256xf32>
    %c0_9 = arith.constant 0 : index
    %c0_10 = arith.constant 0 : index
    %20 = vector.load %arg4[%c0_9, %c0_10] : memref<4x1xf32, #tpu.memory_space<vmem>>, vector<4x1xf32>
    %21 = vector.broadcast %20 : vector<4x1xf32> to vector<4x256xf32>
    %22 = arith.addf %19, %21 : vector<4x256xf32>
    %c0_11 = arith.constant 0 : index
    %c0_12 = arith.constant 0 : index
    %c0_13 = arith.constant 0 : index
    %23 = vector.load %arg5[%c0_11, %c0_12, %c0_13] : memref<1x4x256xf32, #tpu.memory_space<vmem>>, vector<1x4x256xf32>
    %24 = vector.shape_cast %23 : vector<1x4x256xf32> to vector<4x256xf32>
    %25 = vector.shape_cast %22 : vector<4x256xf32> to vector<1x4x256xf32>
    tpu.vector_store %arg5[%c0_11, %c0_12, %c0_13], %25 {strides = array<i32>} : memref<1x4x256xf32, #tpu.memory_space<vmem>>, vector<1x4x256xf32>,
    return
  }
  func.func @transform_0(%arg0: i32, %arg1: i32) -> (i32, i32, i32) {
    %c0_i32 = arith.constant 0 : i32
    %c0_i32_0 = arith.constant 0 : i32
    return %arg0, %c0_i32, %arg1 : i32, i32, i32
  }
  func.func @transform_1(%arg0: i32, %arg1: i32) -> (i32, i32) {
    %c0_i32 = arith.constant 0 : i32
    %c0_i32_0 = arith.constant 0 : i32
    %c0_i32_1 = arith.constant 0 : i32
    return %c0_i32, %c0_i32_0 : i32, i32
  }
  func.func @transform_2(%arg0: i32, %arg1: i32) -> (i32, i32) {
    %c0_i32 = arith.constant 0 : i32
    %c0_i32_0 = arith.constant 0 : i32
    %c0_i32_1 = arith.constant 0 : i32
    return %c0_i32, %c0_i32_0 : i32, i32
  }
  func.func @transform_3(%arg0: i32, %arg1: i32) -> (i32, i32, i32) {
    %c0_i32 = arith.constant 0 : i32
    %c0_i32_0 = arith.constant 0 : i32
    return %arg0, %c0_i32, %arg1 : i32, i32, i32
  }
}

</mosaic_0001>

<llo_original>
// kernel: prenorm_conv1x1.1
$region0: #{prenorm_conv1x1.1}
  #allocation0 [shape = 'u32[]', space=smem, size = 0x4, offset = 0x4, fixed_abs, tag = 'smem constant byte address 0x4 - core index']
  #allocation1 [shape = 'u32[144,128]{1,0:T(1,128)}', space=vmem, size = 0x12000, scoped, tag = 'internal scratch']
  %s0 = inlined_call_operand.vmem [shape: f32[2,4,256], index: 0, kind: input, shape index: {}]
  %s1 = inlined_call_operand.vmem [shape: f32[4,4], index: 1, kind: input, shape index: {}]
  %s2 = inlined_call_operand.vmem [shape: f32[4,1], index: 2, kind: input, shape index: {}]
  %s3 = inlined_call_operand.vmem [shape: f32[2,4,256], index: 3, kind: output, shape index: {}]
  %s4 = sld [smem:[#allocation0]]
  $region45: #{prenorm_conv1x1.1} parent=0
    _
  %s6 = ssub.s32 1, %s4
  %s7 = scalar_select 0, %s6, %s4
  loop: start=0, step=1, limit=4
  $region2: #{prenorm_conv1x1.1} parent=0 // loop_pre_header
    _
  $region3: #{prenorm_conv1x1.1} parent=0 // loop_header
    %s9 = sphi 0, %s13
    %p10 = scmp.ge.s32.totalorder %s9, 4
    %s16 = sphi 0, %s28
    %s17 = sphi 0, %s24
    %s18 = sphi 0, %s16
    %s19 = sphi 0, %s17
    %s20 = sphi 0, %s18
    %s21 = sphi 0, %s19
    %s33 = sphi 0, %s35
    %s36 = sphi 0, %s33
    %s37 = sphi 0, %s36
    %s53 = sphi 0, %s37
    %s57 = sphi 0, %s57
    %s59 = sphi 0, %s57
    %s60 = sphi 0, %s59
    %s74 = sphi 0, %s60
    %s78 = sphi 0, %s78
    %s80 = sphi 0, %s78
    %s81 = sphi 0, %s80
    %s95 = sphi 0, %s81
    %s103 = sphi 0, %s105
    %s106 = sphi 0, %s103
    %s107 = sphi 0, %s106
    %s123 = sphi 0, %s107
  $region4: #{prenorm_conv1x1.1} parent=0 // loop_header_branch
    %12 = sbr.rel (%p10) target = $region8
  $region5: #{prenorm_conv1x1.1} parent=0 // loop_body
    %s14 = ssub.s32 %s9, 1
    %s15 = ssub.s32 %s9, 2
    %s22 = sadd.s32 1, %s17
    %p23 = scmp.ge.s32.totalorder %s22, 1
    %s24 = scalar_select %p23, 0, %s22
    %s25 = sadd.s32 1, %s16
    %s26 = scalar_select %p23, %s25, %s16
    %p27 = scmp.ge.s32.totalorder %s26, 2
    %s28 = scalar_select %p27, 0, %s26
    %s29 = ssub.s32 %s16, %s28
    %s30 = ssub.s32 %s17, %s24
    %s31 = sor.u32 %s29, %s30
    %p32 = scmp.eq.s32.totalorder %s31, 0
    %s34 = sadd.s32 %s33, 1
    %s35 = scalar_select %p32, %s33, %s34
    %p38 = pneg %p32
    %p39 = scmp.eq.s32.totalorder %s9, 1
    %p40 = por %p38, %p39
    %p41 = scmp.ne.s32.totalorder %s33, %s36
    %p42 = scmp.eq.s32.totalorder %s9, 0
    %p43 = por %p41, %p42
    %p44 = scmp.ne.s32.totalorder %s33, %s36
    %p45 = scmp.eq.s32.totalorder %s14, 1
    %p46 = por %p44, %p45
    %p47 = scmp.ne.s32.totalorder %s36, %s37
    %p48 = scmp.eq.s32.totalorder %s14, 0
    %p49 = por %p47, %p48
    %p50 = scmp.ne.s32.totalorder %s36, %s37
    %p51 = scmp.eq.s32.totalorder %s15, 1
    %p52 = por %p50, %p51
    %p54 = scmp.ne.s32.totalorder %s37, %s53
    %p55 = scmp.eq.s32.totalorder %s15, 0
    %p56 = por %p54, %p55
    %s58 = sadd.s32 %s57, 1
    %p61 = scmp.eq.s32.totalorder %s9, 1
    %p62 = scmp.ne.s32.totalorder %s57, %s59
    %p63 = scmp.eq.s32.totalorder %s9, 0
    %p64 = por %p62, %p63
    %p65 = scmp.ne.s32.totalorder %s57, %s59
    %p66 = scmp.eq.s32.totalorder %s14, 1
    %p67 = por %p65, %p66
    %p68 = scmp.ne.s32.totalorder %s59, %s60
    %p69 = scmp.eq.s32.totalorder %s14, 0
    %p70 = por %p68, %p69
    %p71 = scmp.ne.s32.totalorder %s59, %s60
    %p72 = scmp.eq.s32.totalorder %s15, 1
    %p73 = por %p71, %p72
    %p75 = scmp.ne.s32.totalorder %s60, %s74
    %p76 = scmp.eq.s32.totalorder %s15, 0
    %p77 = por %p75, %p76
    %s79 = sadd.s32 %s78, 1
    %p82 = scmp.eq.s32.totalorder %s9, 1
    %p83 = scmp.ne.s32.totalorder %s78, %s80
    %p84 = scmp.eq.s32.totalorder %s9, 0
    %p85 = por %p83, %p84
    %p86 = scmp.ne.s32.totalorder %s78, %s80
    %p87 = scmp.eq.s32.totalorder %s14, 1
    %p88 = por %p86, %p87
    %p89 = scmp.ne.s32.totalorder %s80, %s81
    %p90 = scmp.eq.s32.totalorder %s14, 0
    %p91 = por %p89, %p90
    %p92 = scmp.ne.s32.totalorder %s80, %s81
    %p93 = scmp.eq.s32.totalorder %s15, 1
    %p94 = por %p92, %p93
    %p96 = scmp.ne.s32.totalorder %s81, %s95
    %p97 = scmp.eq.s32.totalorder %s15, 0
    %p98 = por %p96, %p97
    %s99 = ssub.s32 %s16, %s28
    %s100 = ssub.s32 %s17, %s24
    %s101 = sor.u32 %s99, %s100
    %p102 = scmp.eq.s32.totalorder %s101, 0
    %s104 = sadd.s32 %s103, 1
    %s105 = scalar_select %p102, %s103, %s104
    %p108 = pneg %p102
    %p109 = scmp.eq.s32.totalorder %s9, 1
    %p110 = por %p108, %p109
    %p111 = scmp.ne.s32.totalorder %s103, %s106
    %p112 = scmp.eq.s32.totalorder %s9, 0
    %p113 = por %p111, %p112
    %p114 = scmp.ne.s32.totalorder %s103, %s106
    %p115 = scmp.eq.s32.totalorder %s14, 1
    %p116 = por %p114, %p115
    %p117 = scmp.ne.s32.totalorder %s106, %s107
    %p118 = scmp.eq.s32.totalorder %s14, 0
    %p119 = por %p117, %p118
    %p120 = scmp.ne.s32.totalorder %s106, %s107
    %p121 = scmp.eq.s32.totalorder %s15, 1
    %p122 = por %p120, %p121
    %p124 = scmp.ne.s32.totalorder %s107, %s123
    %p125 = scmp.eq.s32.totalorder %s15, 0
    %p126 = por %p124, %p125
    %p127 = scmp.le.s32.totalorder 1, %s9
    %p128 = scmp.lt.s32.totalorder %s9, 3
    %p129 = pnand %p127, %p128
    %p130 = pneg %p129
    // Predicated region
    $region9: #{prenorm_conv1x1.1} parent=5 // pred_check
      _
    $region10: #{prenorm_conv1x1.1} parent=5 // pred_check_branch
      %132 = sbr.rel (%p129) target = $region12
    $region11: #{prenorm_conv1x1.1} parent=5 // pred_region
      %s133 = ssub.s32 %s9, 1
      // Predicated region
      $region13: #{prenorm_conv1x1.1} parent=11 // pred_check
        %p134 = pneg %p70
      $region14: #{prenorm_conv1x1.1} parent=11 // pred_check_branch
        %136 = sbr.rel (%p134) target = $region16
      $region15: #{prenorm_conv1x1.1} parent=11 // pred_region
        _
      $region16: #{prenorm_conv1x1.1} parent=11 // pred_fallthru
        _
      // Predicated region
      $region17: #{prenorm_conv1x1.1} parent=11 // pred_check
        %p137 = pneg %p91
      $region18: #{prenorm_conv1x1.1} parent=11 // pred_check_branch
        %139 = sbr.rel (%p137) target = $region20
      $region19: #{prenorm_conv1x1.1} parent=11 // pred_region
        _
      $region20: #{prenorm_conv1x1.1} parent=11 // pred_fallthru
        _
    $region12: #{prenorm_conv1x1.1} parent=5 // pred_fallthru
      _
    %p140 = scmp.lt.s32.totalorder %s9, 2
    // Predicated region
    $region21: #{prenorm_conv1x1.1} parent=5 // pred_check
      %p141 = pneg %p140
    $region22: #{prenorm_conv1x1.1} parent=5 // pred_check_branch
      %143 = sbr.rel (%p141) target = $region24
    $region23: #{prenorm_conv1x1.1} parent=5 // pred_region
      // Predicated region
      $region25: #{prenorm_conv1x1.1} parent=23 // pred_check
        %p144 = pneg %p43
      $region26: #{prenorm_conv1x1.1} parent=23 // pred_check_branch
        %146 = sbr.rel (%p144) target = $region28
      $region27: #{prenorm_conv1x1.1} parent=23 // pred_region
        %s147 = smul.u32 2, %s17
        %p148 = scmp.lt.s32.totalorder %s16, 1
        %s149 = scalar_select %p148, %s16, 1
        %p150 = scmp.lt.s32.totalorder %s147, 1
        %s151 = scalar_select %p150, %s147, 1
        %s152 = smul.addr %s149, 2
        %s153 = sadd.s32 %s151, %s152
        %s154 = smul.addr %s153, 4
        %s155 = scalar_lea.vmem %s0, %s154
        %s156 = smul.u32 2, %s17
      $region28: #{prenorm_conv1x1.1} parent=23 // pred_fallthru
        _
    $region24: #{prenorm_conv1x1.1} parent=5 // pred_fallthru
      _
    %p157 = scmp.le.s32.totalorder 1, %s9
    %p158 = scmp.lt.s32.totalorder %s9, 3
    %p159 = pnand %p157, %p158
    %p160 = pneg %p159
    // Predicated region
    $region29: #{prenorm_conv1x1.1} parent=5 // pred_check
      _
    $region30: #{prenorm_conv1x1.1} parent=5 // pred_check_branch
      %162 = sbr.rel (%p159) target = $region32
    $region31: #{prenorm_conv1x1.1} parent=5 // pred_region
      %s163 = ssub.s32 %s9, 1
      %s164 = smul.u32 2, %s19
      %p165 = scmp.lt.s32.totalorder %s18, 1
      %s166 = scalar_select %p165, %s18, 1
      %p167 = scmp.lt.s32.totalorder %s164, 1
      %s168 = scalar_select %p167, %s164, 1
      %s169 = smul.addr %s166, 2
      %s170 = sadd.s32 %s168, %s169
      %s171 = smul.addr %s170, 4
      %s172 = scalar_lea.vmem %s0, %s171
      %p173 = pneg %p49
      %p174 = pneg %p46
      %p175 = pneg %p70
      %p176 = pneg %p67
      %p177 = pneg %p91
      %p178 = pneg %p88
      %p179 = pneg %p119
      %p180 = pneg %p116
      %s181 = smul.u32 2, %s19
      %p182 = scmp.lt.s32.totalorder %s18, 1
      %s183 = scalar_select %p182, %s18, 1
      %p184 = scmp.lt.s32.totalorder %s181, 1
      %s185 = scalar_select %p184, %s181, 1
      %s186 = smul.addr %s183, 2
      %s187 = sadd.s32 %s185, %s186
      %s188 = smul.addr %s187, 4
      %s189 = scalar_lea.vmem %s3, %s188
      %s190 = smul.u32 2, %s19
      %p191 = scmp.lt.s32.totalorder %s18, 1
      %s192 = scalar_select %p191, %s18, 1
      %p193 = scmp.lt.s32.totalorder %s190, 1
      %s194 = scalar_select %p193, %s190, 1
      %s195 = smul.addr %s192, 2
      %s196 = sadd.s32 %s194, %s195
      %s197 = smul.addr %s196, 4
      %s198 = scalar_lea.vmem %s0, %s197
      %s199 = smul.u32 2, %s19
      %s200 = smul.u32 2, %s19
      %p201 = scmp.lt.s32.totalorder %s18, 1
      %s202 = scalar_select %p201, %s18, 1
      %p203 = scmp.lt.s32.totalorder %s200, 1
      %s204 = scalar_select %p203, %s200, 1
      %s205 = smul.addr %s202, 2
      %s206 = sadd.s32 %s204, %s205
      %s207 = smul.addr %s206, 4
      %s208 = scalar_lea.vmem %s3, %s207
      %s209 = smul.u32 2, %s19
      %v210 = vld [vmem:[%s198] sm:$0xff]
      %v212 = vcombine.high %v210, %v210
      %vm214 = vcmask 1043456
      %v215 = vsel %vm214, %v210, 0.0
      %v216 = vrot.slane %v215, 4
      %v217 = vadd.f32 %v215, %v216
      %v218 = vrot.slane %v217, 2
      %v219 = vadd.f32 %v217, %v218
      %v220 = vrot.slane %v219, 1
      %v221 = vadd.f32 %v219, %v220
      %v222 = vsel %vm214, %v212, 0.0
      %v223 = vrot.slane %v222, 4
      %v224 = vadd.f32 %v222, %v223
      %v225 = vrot.slane %v224, 2
      %v226 = vadd.f32 %v224, %v225
      %v227 = vrot.slane %v226, 1
      %v228 = vadd.f32 %v226, %v227
      %v229 = vrcp.pop 4.0
      %v230 = vmul.f32 %v221, %v229
      %v231 = vmul.f32 %v228, %v229
      %v234 = vcombine.low %v230, %v231
      %v236 = vsub.f32 %v210, %v234
      %v237 = vmul.f32 %v236, %v236
      %v239 = vcombine.high %v237, %v237
      %v241 = vsel %vm214, %v237, 0.0
      %v242 = vrot.slane %v241, 4
      %v243 = vadd.f32 %v241, %v242
      %v244 = vrot.slane %v243, 2
      %v245 = vadd.f32 %v243, %v244
      %v246 = vrot.slane %v245, 1
      %v247 = vadd.f32 %v245, %v246
      %v248 = vsel %vm214, %v239, 0.0
      %v249 = vrot.slane %v248, 4
      %v250 = vadd.f32 %v248, %v249
      %v251 = vrot.slane %v250, 2
      %v252 = vadd.f32 %v250, %v251
      %v253 = vrot.slane %v252, 1
      %v254 = vadd.f32 %v252, %v253
      %v255 = vmul.f32 %v247, %v229
      %v256 = vmul.f32 %v254, %v229
      %v257 = vadd.f32 %v255, 1e-05
      %v258 = vadd.f32 %v256, 1e-05
      %v259 = vrsqrt.pop %v257
      %v260 = vrsqrt.pop %v258
      %v263 = vcombine.low %v259, %v260
      %v265 = vmul.f32 %v236, %v263
      %v266 = vld [vmem:[%s1] sm:$0xf]
      %v267 = vld [vmem:[%s2] sm:$0xf]
      %269 = vset.pattern.permute.xlu0 0
      %270 = vperm.xlu0 %269, %v267
      %v271 = vpop.permute.xlu0 %270
      %v274 = vcombine.high %v265, %v265
      %vm275 = vcmask 31744
      %v277 = vsel %vm275, %v266, 0
      %v279 = vsel %vm214, %v265, 0
      %v281 = vsel %vm214, %v274, 0
      %283 = vmatprep.subr.mxu0 %v281
      %284 = vmatpush1.msra.mxu0 %v279
      %285 = vmatprep.subr.mxu0 0.0
      %286 = vmatpush1.msra.mxu0 0.0
      %287 = vmatprep.subr.mxu0 0.0
      %288 = vmatpush1.msra.mxu0 0.0
      %289 = vmatprep.subr.mxu0 0.0
      %290 = vmatpush1.msra.mxu0 0.0
      %291 = vmatprep.subr.mxu0 0.0
      %292 = vmatpush1.msra.mxu0 0.0
      %293 = vmatprep.subr.mxu0 0.0
      %294 = vmatpush1.msra.mxu0 0.0
      %295 = vmatprep.subr.mxu0 0.0
      %296 = vmatpush1.msra.mxu0 0.0
      %297 = vmatprep.subr.mxu0 0.0
      %298 = vmatpush1.msra.mxu0 0.0
      %299 = vmatprep.subr.mxu0 0.0
      %300 = vmatpush1.msra.mxu0 0.0
      %301 = vmatprep.subr.mxu0 0.0
      %302 = vmatpush1.msra.mxu0 0.0
      %303 = vmatprep.subr.mxu0 0.0
      %304 = vmatpush1.msra.mxu0 0.0
      %305 = vmatprep.subr.mxu0 0.0
      %306 = vmatpush1.msra.mxu0 0.0
      %307 = vmatprep.subr.mxu0 0.0
      %308 = vmatpush1.msra.mxu0 0.0
      %309 = vmatprep.subr.mxu0 0.0
      %310 = vmatpush1.msra.mxu0 0.0
      %311 = vmatprep.subr.mxu0 0.0
      %312 = vmatpush1.msra.mxu0 0.0
      %313 = vmatprep.subr.mxu0 0.0
      %314 = vmatpush1.msra.mxu0 0.0
      %315 = vmatprep.subr.mxu0 0.0
      %316 = vmatpush1.msra.mxu0 0.0
      %317 = vmatprep.subr.mxu0 0.0
      %318 = vmatpush1.msra.mxu0 0.0
      %319 = vmatprep.subr.mxu0 0.0
      %320 = vmatpush1.msra.mxu0 0.0
      %321 = vmatprep.subr.mxu0 0.0
      %322 = vmatpush1.msra.mxu0 0.0
      %323 = vmatprep.subr.mxu0 0.0
      %324 = vmatpush1.msra.mxu0 0.0
      %325 = vmatprep.subr.mxu0 0.0
      %326 = vmatpush1.msra.mxu0 0.0
      %327 = vmatprep.subr.mxu0 0.0
      %328 = vmatpush1.msra.mxu0 0.0
      %329 = vmatprep.subr.mxu0 0.0
      %330 = vmatpush1.msra.mxu0 0.0
      %331 = vmatprep.subr.mxu0 0.0
      %332 = vmatpush1.msra.mxu0 0.0
      %333 = vmatprep.subr.mxu0 0.0
      %334 = vmatpush1.msra.mxu0 0.0
      %335 = vmatprep.subr.mxu0 0.0
      %336 = vmatpush1.msra.mxu0 0.0
      %337 = vmatprep.subr.mxu0 0.0
      %338 = vmatpush1.msra.mxu0 0.0
      %339 = vmatprep.subr.mxu0 0.0
      %340 = vmatpush1.msra.mxu0 0.0
      %341 = vmatprep.subr.mxu0 0.0
      %342 = vmatpush1.msra.mxu0 0.0
      %343 = vmatprep.subr.mxu0 0.0
      %344 = vmatpush1.msra.mxu0 0.0
      %345 = vmatprep.subr.mxu0 0.0
      %346 = vmatpush1.msra.mxu0 0.0
      %347 = vmatprep.mubr.f32.mxu0 0.0
      %348 = vmatmul.mubr.f32.gmra.mrb[0].mxu0 %v277
      %v349 = vpop.f32.mrb[0].mxu0
      %v350 = vadd.f32 %v271, %v349
      %v351 = vpop.f32.mrb[0].mxu0
      %v352 = vadd.f32 %v271, %v351
      %353 = vdwg.mxu0
      %v356 = vcombine.low %v350, %v352
      %358 = vst [vmem:[%s208] sm:$0xff] %v356
      %s359 = smul.u32 2, %s19
      %p360 = scmp.lt.s32.totalorder %s18, 1
      %s361 = scalar_select %p360, %s18, 1
      %p362 = scmp.lt.s32.totalorder %s359, 1
      %s363 = scalar_select %p362, %s359, 1
      %s364 = smul.addr %s361, 2
      %s365 = sadd.s32 %s363, %s364
      %s366 = smul.addr %s365, 4
      %s367 = scalar_lea.vmem %s3, %s366
      // Predicated region
      $region33: #{prenorm_conv1x1.1} parent=31 // pred_check
        %p368 = pneg %p116
      $region34: #{prenorm_conv1x1.1} parent=31 // pred_check_branch
        %370 = sbr.rel (%p368) target = $region36
      $region35: #{prenorm_conv1x1.1} parent=31 // pred_region
        %s371 = smul.u32 2, %s19
      $region36: #{prenorm_conv1x1.1} parent=31 // pred_fallthru
        _
    $region32: #{prenorm_conv1x1.1} parent=5 // pred_fallthru
      _
    %p372 = scmp.le.s32.totalorder 2, %s9
    // Predicated region
    $region37: #{prenorm_conv1x1.1} parent=5 // pred_check
      %p373 = pneg %p372
    $region38: #{prenorm_conv1x1.1} parent=5 // pred_check_branch
      %375 = sbr.rel (%p373) target = $region40
    $region39: #{prenorm_conv1x1.1} parent=5 // pred_region
      %s376 = ssub.s32 %s9, 2
      // Predicated region
      $region41: #{prenorm_conv1x1.1} parent=39 // pred_check
        %p377 = pneg %p122
      $region42: #{prenorm_conv1x1.1} parent=39 // pred_check_branch
        %379 = sbr.rel (%p377) target = $region44
      $region43: #{prenorm_conv1x1.1} parent=39 // pred_region
        %s380 = smul.u32 2, %s21
        %p381 = scmp.lt.s32.totalorder %s20, 1
        %s382 = scalar_select %p381, %s20, 1
        %p383 = scmp.lt.s32.totalorder %s380, 1
        %s384 = scalar_select %p383, %s380, 1
        %s385 = smul.addr %s382, 2
        %s386 = sadd.s32 %s384, %s385
        %s387 = smul.addr %s386, 4
        %s388 = scalar_lea.vmem %s3, %s387
      $region44: #{prenorm_conv1x1.1} parent=39 // pred_fallthru
        _
    $region40: #{prenorm_conv1x1.1} parent=5 // pred_fallthru
      _
  $region6: #{prenorm_conv1x1.1} parent=0 // loop_footer
    %s13 = sadd.s32 1, %s9
  $region7: #{prenorm_conv1x1.1} parent=0 // loop_footer_branch
    %8 = sbr.rel target = $region3
  $region8: #{prenorm_conv1x1.1} parent=0 // loop_exit
    _

</llo_original>
